<compile_context>
chip_gen: v7x
topology: tpu7x:2x2x1
jax: 0.10.0
libtpu: 0.0.40
codegen_flags: <defaults>
</compile_context>

<pallas_src>
import jax
import jax.numpy as jnp
from jax.experimental import pallas as pl
from jax.experimental.pallas import tpu as pltpu

# Discriminator MLP: z_size -> 512 -> 256 -> 128 -> 64 -> 1
# ReLU after every layer except the last (logit output).

LAYER_SIZES = [512, 256, 128, 64, 1]
_OUT_LANES = 128  # lane-dense output width; the logit lives in column 0.


def _disc_kernel(x_ref,
                 w1_ref, b1_ref,
                 w2_ref, b2_ref,
                 w3_ref, b3_ref,
                 w4_ref, b4_ref,
                 w5_ref, b5_ref,
                 o_ref):
    """Fused 5-layer MLP for one batch tile. All weights resident in VMEM.

    Layers 1-4 run on the MXU with bf16 inputs and f32 accumulation; the bias
    add + ReLU epilogue stays in f32 (v5e VPU has no bf16 datapath). The final
    64 -> 1 layer is a VPU multiply + lane reduction instead of an N=1 MXU
    matmul, and the logit column is broadcast across 128 lanes so the store is
    an unmasked, lane-dense vst (the wrapper slices column 0 back out).
    """
    bf16 = jnp.bfloat16
    f32 = jnp.float32

    h = x_ref[...]
    # Layer 1: z_size -> 512, ReLU
    h = jnp.dot(h.astype(bf16), w1_ref[...], preferred_element_type=f32) + b1_ref[...]
    h = jnp.maximum(h, 0.0)
    # Layer 2: 512 -> 256, ReLU
    h = jnp.dot(h.astype(bf16), w2_ref[...], preferred_element_type=f32) + b2_ref[...]
    h = jnp.maximum(h, 0.0)
    # Layer 3: 256 -> 128, ReLU
    h = jnp.dot(h.astype(bf16), w3_ref[...], preferred_element_type=f32) + b3_ref[...]
    h = jnp.maximum(h, 0.0)
    # Layer 4: 128 -> 64, ReLU
    h = jnp.dot(h.astype(bf16), w4_ref[...], preferred_element_type=f32) + b4_ref[...]
    h = jnp.maximum(h, 0.0)
    # Layer 5: 64 -> 1 (logit, no activation). w5 is passed as a (1, 64) f32 row:
    # broadcast-multiply + lane reduction rides the VPU/XLU slots instead of an
    # N=1 (wasteful) MXU matmul.
    logit = jnp.sum(h * w5_ref[...], axis=-1, keepdims=True) + b5_ref[...]

    o_ref[...] = jnp.broadcast_to(logit, o_ref.shape).astype(o_ref.dtype)


def _default_tile_b(B):
    """Bounded batch tile.

    Large batches: fixed 512 rows (multiple of 256/128 for the MXU M dim, keeps the
    512-wide f32 activation ~1 MiB, and guarantees >=2 grid steps so v7x can split
    the "parallel" axis across its two TensorCores). Small batches: aim for 2 grid
    steps while respecting the 8-row sublane granularity.
    """
    if B >= 1024:
        return 512
    tile = -(-B // 2)                 # ceil(B / 2): >=2 grid steps when possible
    tile = ((tile + 7) // 8) * 8      # sublane multiple of 8
    return max(8, min(tile, 512))


def discriminator_forward(x, params, *, tile_b=None):
    """x: (B, z_size) float32. params: list of (W, b) with W: (in, out), b: (1, out)."""
    B, z_size = x.shape
    if tile_b is None:
        tile_b = _default_tile_b(B)
    assert tile_b % 8 == 0, "batch tile must be a multiple of 8 sublanes"

    num_tiles = pl.cdiv(B, tile_b)
    B_pad = num_tiles * tile_b
    if B_pad != B:
        # Pad the batch instead of forcing tile_b = B; padded rows are sliced off below.
        x = jnp.pad(x, ((0, B_pad - B), (0, 0)))

    (w1, b1), (w2, b2), (w3, b3), (w4, b4), (w5, b5) = params
    # Layers 1-4 weights in bf16 (MXU-native, halves resident VMEM); layer-5 weight as
    # an f32 (1, 64) row for the in-kernel lane reduction. Biases stay f32 (f32 epilogue).
    flat_params = [
        w1.astype(jnp.bfloat16), b1.astype(jnp.float32),
        w2.astype(jnp.bfloat16), b2.astype(jnp.float32),
        w3.astype(jnp.bfloat16), b3.astype(jnp.float32),
        w4.astype(jnp.bfloat16), b4.astype(jnp.float32),
        w5.reshape(1, -1).astype(jnp.float32), b5.reshape(1, 1).astype(jnp.float32),
    ]

    # Weight / bias specs: full arrays with a constant block index -> resident across
    # the batch grid (Pallas skips re-DMA when the block index does not change).
    wb_specs = [pl.BlockSpec(p.shape, lambda i: (0, 0)) for p in flat_params]
    in_specs = [pl.BlockSpec((tile_b, z_size), lambda i: (i, 0))] + wb_specs
    # Lane-dense (128-wide) output block: unmasked full-vreg stores; column 0 = logit.
    out_spec = pl.BlockSpec((tile_b, _OUT_LANES), lambda i: (i, 0))

    # Advisory cost estimate so XLA can overlap this small kernel with surrounding ops.
    weight_bytes = int(sum(p.size * p.dtype.itemsize for p in flat_params))
    flops = 2 * B_pad * (z_size * 512 + 512 * 256 + 256 * 128 + 128 * 64 + 64 * 1)
    bytes_accessed = B_pad * z_size * 4 + B_pad * _OUT_LANES * 4 + weight_bytes

    out = pl.pallas_call(
        _disc_kernel,
        out_shape=jax.ShapeDtypeStruct((B_pad, _OUT_LANES), jnp.float32),
        grid_spec=pltpu.PrefetchScalarGridSpec(
            num_scalar_prefetch=0,
            grid=(num_tiles,),
            in_specs=in_specs,
            out_specs=out_spec,
        ),
        compiler_params=pltpu.CompilerParams(
            dimension_semantics=("parallel",),
        ),
        cost_estimate=pl.CostEstimate(
            flops=flops, transcendentals=0, bytes_accessed=bytes_accessed),
    )(x, *flat_params)

    return out[:B, :1]


def init_params(z_size, key):
    """Deterministic PyTorch-style (Kaiming-uniform) init for each nn.Linear."""
    params = []
    in_f = z_size
    for out_f in LAYER_SIZES:
        key, kw, kb = jax.random.split(key, 3)
        bound = 1.0 / jnp.sqrt(jnp.float32(in_f))
        # Stored as (in, out) so the kernel does x @ W.
        w = jax.random.uniform(kw, (in_f, out_f), jnp.float32, -bound, bound)
        b = jax.random.uniform(kb, (1, out_f), jnp.float32, -bound, bound)
        params.append((w, b))
        in_f = out_f
    return params


def reference_forward(x, params):
    """Pure-JAX reference mirroring the kernel numerics (bf16 matmul inputs, f32 accum)."""
    h = x
    n = len(params)
    for i, (w, b) in enumerate(params):
        if i < n - 1:
            h = jnp.dot(h.astype(jnp.bfloat16), w.astype(jnp.bfloat16),
                        preferred_element_type=jnp.float32) + b
            h = jnp.maximum(h, 0.0)
        else:
            h = h @ w + b  # final 64 -> 1 layer stays f32 in the kernel as well
    return h


def reference_forward_f32(x, params):
    """Full-f32 reference (module semantics)."""
    h = x
    for i, (w, b) in enumerate(params):
        h = h @ w + b
        if i < len(params) - 1:
            h = jnp.maximum(h, 0.0)
    return h


if __name__ == "__main__":
    key = jax.random.PRNGKey(0)
    z_size = 32          # config['z_size'] (small shape for the smoke test)
    batch = 16           # small batch; tile picker gives 2 grid steps of 8 rows

    key, kx = jax.random.split(key)
    x = jax.random.normal(kx, (batch, z_size), jnp.float32)

    params = init_params(z_size, jax.random.PRNGKey(0))

    logit = discriminator_forward(x, params)
    logit = jax.block_until_ready(logit)
    assert logit.shape == (batch, 1), logit.shape

    ref = reference_forward(x, params)          # matches kernel precision path
    ref_f32 = reference_forward_f32(x, params)  # full-precision module semantics
    assert jnp.allclose(logit, ref, atol=2e-3, rtol=2e-3), (
        "mismatch vs bf16-matched reference", float(jnp.max(jnp.abs(logit - ref))))
    assert jnp.allclose(logit, ref_f32, atol=2e-1, rtol=2e-1), (
        "mismatch vs f32 reference", float(jnp.max(jnp.abs(logit - ref_f32))))

    # Exercise the non-divisible-batch (cdiv + pad) path.
    logit_odd = jax.block_until_ready(discriminator_forward(x[:13], params))
    assert logit_odd.shape == (13, 1), logit_odd.shape
    assert jnp.allclose(logit_odd, ref[:13], atol=2e-3, rtol=2e-3)

    print("KERNEL_OK")
</pallas_src>

<mosaic_0001>
module attributes {stable_mosaic.version = 11 : i64} {
  func.func @_disc_kernel(%arg0: i32, %arg1: memref<8x32xf32, #tpu.memory_space<vmem>>, %arg2: memref<32x512xbf16, #tpu.memory_space<vmem>>, %arg3: memref<1x512xf32, #tpu.memory_space<vmem>>, %arg4: memref<512x256xbf16, #tpu.memory_space<vmem>>, %arg5: memref<1x256xf32, #tpu.memory_space<vmem>>, %arg6: memref<256x128xbf16, #tpu.memory_space<vmem>>, %arg7: memref<1x128xf32, #tpu.memory_space<vmem>>, %arg8: memref<128x64xbf16, #tpu.memory_space<vmem>>, %arg9: memref<1x64xf32, #tpu.memory_space<vmem>>, %arg10: memref<1x64xf32, #tpu.memory_space<vmem>>, %arg11: memref<1x1xf32, #tpu.memory_space<vmem>>, %arg12: memref<8x128xf32, #tpu.memory_space<vmem>>) attributes {dimension_semantics = [#tpu.dimension_semantics<parallel>], iteration_bounds = array<i64: 2>, scalar_prefetch = 0 : i64, scratch_operands = 0 : i64, tpu.core_type = #tpu.core_type<tc>, window_params = [{transform_indices = @transform_0, window_bounds = array<i64: 8, 32>}, {pipeline_mode = #tpu.pipeline_mode<synchronous>, transform_indices = @transform_1, window_bounds = array<i64: 32, 512>}, {pipeline_mode = #tpu.pipeline_mode<synchronous>, transform_indices = @transform_2, window_bounds = array<i64: 1, 512>}, {pipeline_mode = #tpu.pipeline_mode<synchronous>, transform_indices = @transform_3, window_bounds = array<i64: 512, 256>}, {pipeline_mode = #tpu.pipeline_mode<synchronous>, transform_indices = @transform_4, window_bounds = array<i64: 1, 256>}, {pipeline_mode = #tpu.pipeline_mode<synchronous>, transform_indices = @transform_5, window_bounds = array<i64: 256, 128>}, {pipeline_mode = #tpu.pipeline_mode<synchronous>, transform_indices = @transform_6, window_bounds = array<i64: 1, 128>}, {pipeline_mode = #tpu.pipeline_mode<synchronous>, transform_indices = @transform_7, window_bounds = array<i64: 128, 64>}, {pipeline_mode = #tpu.pipeline_mode<synchronous>, transform_indices = @transform_8, window_bounds = array<i64: 1, 64>}, {pipeline_mode = #tpu.pipeline_mode<synchronous>, transform_indices = @transform_9, window_bounds = array<i64: 1, 64>}, {pipeline_mode = #tpu.pipeline_mode<synchronous>, transform_indices = @transform_10, window_bounds = array<i64: 1, 1>}, {transform_indices = @transform_11, window_bounds = array<i64: 8, 128>}]} {
    %c0 = arith.constant 0 : index
    %c0_0 = arith.constant 0 : index
    %0 = vector.load %arg1[%c0, %c0_0] : memref<8x32xf32, #tpu.memory_space<vmem>>, vector<8x32xf32>
    %1 = arith.truncf %0 : vector<8x32xf32> to vector<8x32xbf16>
    %c0_1 = arith.constant 0 : index
    %c0_2 = arith.constant 0 : index
    %2 = vector.load %arg2[%c0_1, %c0_2] : memref<32x512xbf16, #tpu.memory_space<vmem>>, vector<32x512xbf16>
    %cst = arith.constant dense<0.000000e+00> : vector<8x512xf32>
    %3 = tpu.matmul %1, %2, %cst {dimension_numbers = #tpu.dot_dimension_numbers<[1], [0], [0], [1], [0, 0, 1, 1], [], []>} : vector<8x32xbf16>, vector<32x512xbf16>, vector<8x512xf32> -> vector<8x512xf32>
    %c0_3 = arith.constant 0 : index
    %c0_4 = arith.constant 0 : index
    %4 = vector.load %arg3[%c0_3, %c0_4] : memref<1x512xf32, #tpu.memory_space<vmem>>, vector<1x512xf32>
    %5 = vector.broadcast %4 : vector<1x512xf32> to vector<8x512xf32>
    %6 = arith.addf %3, %5 : vector<8x512xf32>
    %cst_5 = arith.constant 0.000000e+00 : f32
    %7 = vector.broadcast %cst_5 : f32 to vector<8x512xf32>
    %8 = arith.maximumf %6, %7 : vector<8x512xf32>
    %9 = arith.truncf %8 : vector<8x512xf32> to vector<8x512xbf16>
    %c0_6 = arith.constant 0 : index
    %c0_7 = arith.constant 0 : index
    %10 = vector.load %arg4[%c0_6, %c0_7] : memref<512x256xbf16, #tpu.memory_space<vmem>>, vector<512x256xbf16>
    %cst_8 = arith.constant dense<0.000000e+00> : vector<8x256xf32>
    %11 = tpu.matmul %9, %10, %cst_8 {dimension_numbers = #tpu.dot_dimension_numbers<[1], [0], [0], [1], [0, 0, 1, 1], [], []>} : vector<8x512xbf16>, vector<512x256xbf16>, vector<8x256xf32> -> vector<8x256xf32>
    %c0_9 = arith.constant 0 : index
    %c0_10 = arith.constant 0 : index
    %12 = vector.load %arg5[%c0_9, %c0_10] : memref<1x256xf32, #tpu.memory_space<vmem>>, vector<1x256xf32>
    %13 = vector.broadcast %12 : vector<1x256xf32> to vector<8x256xf32>
    %14 = arith.addf %11, %13 : vector<8x256xf32>
    %cst_11 = arith.constant 0.000000e+00 : f32
    %15 = vector.broadcast %cst_11 : f32 to vector<8x256xf32>
    %16 = arith.maximumf %14, %15 : vector<8x256xf32>
    %17 = arith.truncf %16 : vector<8x256xf32> to vector<8x256xbf16>
    %c0_12 = arith.constant 0 : index
    %c0_13 = arith.constant 0 : index
    %18 = vector.load %arg6[%c0_12, %c0_13] : memref<256x128xbf16, #tpu.memory_space<vmem>>, vector<256x128xbf16>
    %cst_14 = arith.constant dense<0.000000e+00> : vector<8x128xf32>
    %19 = tpu.matmul %17, %18, %cst_14 {dimension_numbers = #tpu.dot_dimension_numbers<[1], [0], [0], [1], [0, 0, 1, 1], [], []>} : vector<8x256xbf16>, vector<256x128xbf16>, vector<8x128xf32> -> vector<8x128xf32>
    %c0_15 = arith.constant 0 : index
    %c0_16 = arith.constant 0 : index
    %20 = vector.load %arg7[%c0_15, %c0_16] : memref<1x128xf32, #tpu.memory_space<vmem>>, vector<1x128xf32>
    %21 = vector.broadcast %20 : vector<1x128xf32> to vector<8x128xf32>
    %22 = arith.addf %19, %21 : vector<8x128xf32>
    %cst_17 = arith.constant 0.000000e+00 : f32
    %23 = vector.broadcast %cst_17 : f32 to vector<8x128xf32>
    %24 = arith.maximumf %22, %23 : vector<8x128xf32>
    %25 = arith.truncf %24 : vector<8x128xf32> to vector<8x128xbf16>
    %c0_18 = arith.constant 0 : index
    %c0_19 = arith.constant 0 : index
    %26 = vector.load %arg8[%c0_18, %c0_19] : memref<128x64xbf16, #tpu.memory_space<vmem>>, vector<128x64xbf16>
    %cst_20 = arith.constant dense<0.000000e+00> : vector<8x64xf32>
    %27 = tpu.matmul %25, %26, %cst_20 {dimension_numbers = #tpu.dot_dimension_numbers<[1], [0], [0], [1], [0, 0, 1, 1], [], []>} : vector<8x128xbf16>, vector<128x64xbf16>, vector<8x64xf32> -> vector<8x64xf32>
    %c0_21 = arith.constant 0 : index
    %c0_22 = arith.constant 0 : index
    %28 = vector.load %arg9[%c0_21, %c0_22] : memref<1x64xf32, #tpu.memory_space<vmem>>, vector<1x64xf32>
    %29 = vector.broadcast %28 : vector<1x64xf32> to vector<8x64xf32>
    %30 = arith.addf %27, %29 : vector<8x64xf32>
    %cst_23 = arith.constant 0.000000e+00 : f32
    %31 = vector.broadcast %cst_23 : f32 to vector<8x64xf32>
    %32 = arith.maximumf %30, %31 : vector<8x64xf32>
    %c0_24 = arith.constant 0 : index
    %c0_25 = arith.constant 0 : index
    %33 = vector.load %arg10[%c0_24, %c0_25] : memref<1x64xf32, #tpu.memory_space<vmem>>, vector<1x64xf32>
    %34 = vector.broadcast %33 : vector<1x64xf32> to vector<8x64xf32>
    %35 = arith.mulf %32, %34 : vector<8x64xf32>
    %cst_26 = arith.constant dense<0.000000e+00> : vector<8xf32>
    %36 = vector.multi_reduction <add>, %35, %cst_26 [1] : vector<8x64xf32> to vector<8xf32>
    %37 = vector.shape_cast %36 : vector<8xf32> to vector<8x1xf32>
    %c0_27 = arith.constant 0 : index
    %c0_28 = arith.constant 0 : index
    %38 = vector.load %arg11[%c0_27, %c0_28] : memref<1x1xf32, #tpu.memory_space<vmem>>, vector<1x1xf32>
    %39 = vector.broadcast %38 : vector<1x1xf32> to vector<8x1xf32>
    %40 = arith.addf %37, %39 : vector<8x1xf32>
    %41 = vector.shape_cast %40 : vector<8x1xf32> to vector<8x1xf32>
    %42 = vector.broadcast %41 : vector<8x1xf32> to vector<8x128xf32>
    %c0_29 = arith.constant 0 : index
    %c0_30 = arith.constant 0 : index
    %43 = vector.load %arg12[%c0_29, %c0_30] : memref<8x128xf32, #tpu.memory_space<vmem>>, vector<8x128xf32>
    tpu.vector_store %arg12[%c0_29, %c0_30], %42 {strides = array<i32>} : memref<8x128xf32, #tpu.memory_space<vmem>>, vector<8x128xf32>,
    return
  }
  func.func @transform_0(%arg0: i32) -> (i32, i32) {
    %c0_i32 = arith.constant 0 : i32
    %c0_i32_0 = arith.constant 0 : i32
    return %arg0, %c0_i32 : i32, i32
  }
  func.func @transform_1(%arg0: i32) -> (i32, i32) {
    %c0_i32 = arith.constant 0 : i32
    %c0_i32_0 = arith.constant 0 : i32
    %c0_i32_1 = arith.constant 0 : i32
    return %c0_i32, %c0_i32_0 : i32, i32
  }
  func.func @transform_2(%arg0: i32) -> (i32, i32) {
    %c0_i32 = arith.constant 0 : i32
    %c0_i32_0 = arith.constant 0 : i32
    %c0_i32_1 = arith.constant 0 : i32
    return %c0_i32, %c0_i32_0 : i32, i32
  }
  func.func @transform_3(%arg0: i32) -> (i32, i32) {
    %c0_i32 = arith.constant 0 : i32
    %c0_i32_0 = arith.constant 0 : i32
    %c0_i32_1 = arith.constant 0 : i32
    return %c0_i32, %c0_i32_0 : i32, i32
  }
  func.func @transform_4(%arg0: i32) -> (i32, i32) {
    %c0_i32 = arith.constant 0 : i32
    %c0_i32_0 = arith.constant 0 : i32
    %c0_i32_1 = arith.constant 0 : i32
    return %c0_i32, %c0_i32_0 : i32, i32
  }
  func.func @transform_5(%arg0: i32) -> (i32, i32) {
    %c0_i32 = arith.constant 0 : i32
    %c0_i32_0 = arith.constant 0 : i32
    %c0_i32_1 = arith.constant 0 : i32
    return %c0_i32, %c0_i32_0 : i32, i32
  }
  func.func @transform_6(%arg0: i32) -> (i32, i32) {
    %c0_i32 = arith.constant 0 : i32
    %c0_i32_0 = arith.constant 0 : i32
    %c0_i32_1 = arith.constant 0 : i32
    return %c0_i32, %c0_i32_0 : i32, i32
  }
  func.func @transform_7(%arg0: i32) -> (i32, i32) {
    %c0_i32 = arith.constant 0 : i32
    %c0_i32_0 = arith.constant 0 : i32
    %c0_i32_1 = arith.constant 0 : i32
    return %c0_i32, %c0_i32_0 : i32, i32
  }
  func.func @transform_8(%arg0: i32) -> (i32, i32) {
    %c0_i32 = arith.constant 0 : i32
    %c0_i32_0 = arith.constant 0 : i32
    %c0_i32_1 = arith.constant 0 : i32
    return %c0_i32, %c0_i32_0 : i32, i32
  }
  func.func @transform_9(%arg0: i32) -> (i32, i32) {
    %c0_i32 = arith.constant 0 : i32
    %c0_i32_0 = arith.constant 0 : i32
    %c0_i32_1 = arith.constant 0 : i32
    return %c0_i32, %c0_i32_0 : i32, i32
  }
  func.func @transform_10(%arg0: i32) -> (i32, i32) {
    %c0_i32 = arith.constant 0 : i32
    %c0_i32_0 = arith.constant 0 : i32
    %c0_i32_1 = arith.constant 0 : i32
    return %c0_i32, %c0_i32_0 : i32, i32
  }
  func.func @transform_11(%arg0: i32) -> (i32, i32) {
    %c0_i32 = arith.constant 0 : i32
    %c0_i32_0 = arith.constant 0 : i32
    return %arg0, %c0_i32 : i32, i32
  }
}

</mosaic_0001>

<llo_original>
// kernel: tpu_custom_call.1
$region0: #{tpu_custom_call.1}
  #allocation0 [shape = 'u32[]', space=smem, size = 0x4, offset = 0x4, fixed_abs, tag = 'smem constant byte address 0x4 - core index']
  #allocation1 [shape = 'u32[144,128]{1,0:T(1,128)}', space=vmem, size = 0x12000, scoped, tag = 'internal scratch']
  #allocation2 [shape = 'f32[1,1]{1,0:T(1,128)S(1)}', space=vmem, size = 0x200, scoped, tag = 'scoped memory for tpu_custom_call.1']
  %s0 = inlined_call_operand.vmem [shape: f32[16,32], index: 0, kind: input, shape index: {}]
  %s1 = inlined_call_operand.vmem [shape: bf16[32,512], index: 1, kind: input, shape index: {}]
  %s2 = inlined_call_operand.vmem [shape: f32[1,512], index: 2, kind: input, shape index: {}]
  %s3 = inlined_call_operand.hbm [shape: bf16[512,256], index: 3, kind: input, shape index: {}]
  %s4 = inlined_call_operand.vmem [shape: f32[1,256], index: 4, kind: input, shape index: {}]
  %s5 = inlined_call_operand.hbm [shape: bf16[256,128], index: 5, kind: input, shape index: {}]
  %s6 = inlined_call_operand.vmem [shape: f32[1,128], index: 6, kind: input, shape index: {}]
  %s7 = inlined_call_operand.vmem [shape: bf16[128,64], index: 7, kind: input, shape index: {}]
  %s8 = inlined_call_operand.vmem [shape: f32[1,64], index: 8, kind: input, shape index: {}]
  %s9 = inlined_call_operand.vmem [shape: f32[1,64], index: 9, kind: input, shape index: {}]
  %s10 = inlined_call_operand.<no memory space> [shape: f32[1,1], index: 10, kind: input, shape index: {}]
  %s11 = inlined_call_operand.hbm [shape: f32[16,128], index: 11, kind: output, shape index: {}]
  %s12 = sld [smem:[#allocation0]]
  $region85: #{tpu_custom_call.1} parent=0
    _
  %s14 = ssub.s32 1, %s12
  %s15 = scalar_select 0, %s14, %s12
  %v16 = vstv %s10
  %17 = vst [vmem:[#allocation2] sm:$0x1] %v16
  $region1: #{tpu_custom_call.1} parent=0
    #allocation3 [shape = 'u8[262144]{0}', space=vmem, size = 0x40000, scoped, tag = 'input window, operand 3, single buffered']
    #allocation4 [shape = 's32[2]{0}', space=sflag, size = 0x8, scoped, tag = 'scoped memory for tpu_custom_call.1']
    #allocation5 [shape = 's32[2]{0}', space=sflag, size = 0x8, scoped, tag = 'scoped memory for tpu_custom_call.1']
    #allocation6 [shape = 'u8[65536]{0}', space=vmem, size = 0x10000, scoped, tag = 'input window, operand 5, single buffered']
    #allocation7 [shape = 's32[1]{0}', space=sflag, size = 0x4, scoped, tag = 'scoped memory for tpu_custom_call.1']
    #allocation8 [shape = 'u8[8192]{0}', space=vmem, size = 0x2000, scoped, tag = 'output window, operand 0']
    %18 = vsyncpa [#allocation4], 0
    %19 = vsyncpa [#allocation7], 0
    %20 = vsyncpa [#allocation5], 0
    %s21 = scalar_lea.sflag [#allocation5], 1
    %22 = vsyncpa %s21, 0
    loop: start=0, step=1, limit=4
    $region2: #{tpu_custom_call.1} parent=1 // loop_pre_header
      _
    $region3: #{tpu_custom_call.1} parent=1 // loop_header
      %s24 = sphi 0, %s28
      %p25 = scmp.ge.s32.totalorder %s24, 4
      %s34 = sphi 0, %s36
      %s37 = sphi 0, %s34
      %s38 = sphi 0, %s37
      %s54 = sphi 0, %s38
      %s58 = sphi 0, %s58
      %s60 = sphi 0, %s58
      %s61 = sphi 0, %s60
      %s75 = sphi 0, %s61
      %s79 = sphi 0, %s79
      %s81 = sphi 0, %s79
      %s82 = sphi 0, %s81
      %s96 = sphi 0, %s82
      %s100 = sphi 0, %s100
      %s102 = sphi 0, %s100
      %s103 = sphi 0, %s102
      %s117 = sphi 0, %s103
      %s121 = sphi 0, %s121
      %s123 = sphi 0, %s121
      %s124 = sphi 0, %s123
      %s138 = sphi 0, %s124
      %s142 = sphi 0, %s142
      %s144 = sphi 0, %s142
      %s145 = sphi 0, %s144
      %s159 = sphi 0, %s145
      %s163 = sphi 0, %s163
      %s165 = sphi 0, %s163
      %s166 = sphi 0, %s165
      %s180 = sphi 0, %s166
      %s184 = sphi 0, %s184
      %s186 = sphi 0, %s184
      %s187 = sphi 0, %s186
      %s201 = sphi 0, %s187
      %s205 = sphi 0, %s205
      %s207 = sphi 0, %s205
      %s208 = sphi 0, %s207
      %s222 = sphi 0, %s208
      %s226 = sphi 0, %s226
      %s228 = sphi 0, %s226
      %s229 = sphi 0, %s228
      %s243 = sphi 0, %s229
      %s247 = sphi 0, %s247
      %s249 = sphi 0, %s247
      %s250 = sphi 0, %s249
      %s264 = sphi 0, %s250
      %s270 = sphi 0, %s272
      %s273 = sphi 0, %s270
      %s274 = sphi 0, %s273
      %s290 = sphi 0, %s274
    $region4: #{tpu_custom_call.1} parent=1 // loop_header_branch
      %27 = sbr.rel (%p25) target = $region8
    $region5: #{tpu_custom_call.1} parent=1 // loop_body
      %s29 = ssub.s32 %s24, 1
      %s30 = ssub.s32 %s24, 2
      %s31 = sadd.s32 %s24, 1
      %s32 = ssub.s32 %s24, %s31
      %p33 = scmp.eq.s32.totalorder %s32, 0
      %s35 = sadd.s32 %s34, 1
      %s36 = scalar_select %p33, %s34, %s35
      %p39 = pneg %p33
      %p40 = scmp.eq.s32.totalorder %s24, 1
      %p41 = por %p39, %p40
      %p42 = scmp.ne.s32.totalorder %s34, %s37
      %p43 = scmp.eq.s32.totalorder %s24, 0
      %p44 = por %p42, %p43
      %p45 = scmp.ne.s32.totalorder %s34, %s37
      %p46 = scmp.eq.s32.totalorder %s29, 1
      %p47 = por %p45, %p46
      %p48 = scmp.ne.s32.totalorder %s37, %s38
      %p49 = scmp.eq.s32.totalorder %s29, 0
      %p50 = por %p48, %p49
      %p51 = scmp.ne.s32.totalorder %s37, %s38
      %p52 = scmp.eq.s32.totalorder %s30, 1
      %p53 = por %p51, %p52
      %p55 = scmp.ne.s32.totalorder %s38, %s54
      %p56 = scmp.eq.s32.totalorder %s30, 0
      %p57 = por %p55, %p56
      %s59 = sadd.s32 %s58, 1
      %p62 = scmp.eq.s32.totalorder %s24, 1
      %p63 = scmp.ne.s32.totalorder %s58, %s60
      %p64 = scmp.eq.s32.totalorder %s24, 0
      %p65 = por %p63, %p64
      %p66 = scmp.ne.s32.totalorder %s58, %s60
      %p67 = scmp.eq.s32.totalorder %s29, 1
      %p68 = por %p66, %p67
      %p69 = scmp.ne.s32.totalorder %s60, %s61
      %p70 = scmp.eq.s32.totalorder %s29, 0
      %p71 = por %p69, %p70
      %p72 = scmp.ne.s32.totalorder %s60, %s61
      %p73 = scmp.eq.s32.totalorder %s30, 1
      %p74 = por %p72, %p73
      %p76 = scmp.ne.s32.totalorder %s61, %s75
      %p77 = scmp.eq.s32.totalorder %s30, 0
      %p78 = por %p76, %p77
      %s80 = sadd.s32 %s79, 1
      %p83 = scmp.eq.s32.totalorder %s24, 1
      %p84 = scmp.ne.s32.totalorder %s79, %s81
      %p85 = scmp.eq.s32.totalorder %s24, 0
      %p86 = por %p84, %p85
      %p87 = scmp.ne.s32.totalorder %s79, %s81
      %p88 = scmp.eq.s32.totalorder %s29, 1
      %p89 = por %p87, %p88
      %p90 = scmp.ne.s32.totalorder %s81, %s82
      %p91 = scmp.eq.s32.totalorder %s29, 0
      %p92 = por %p90, %p91
      %p93 = scmp.ne.s32.totalorder %s81, %s82
      %p94 = scmp.eq.s32.totalorder %s30, 1
      %p95 = por %p93, %p94
      %p97 = scmp.ne.s32.totalorder %s82, %s96
      %p98 = scmp.eq.s32.totalorder %s30, 0
      %p99 = por %p97, %p98
      %s101 = sadd.s32 %s100, 1
      %p104 = scmp.eq.s32.totalorder %s24, 1
      %p105 = scmp.ne.s32.totalorder %s100, %s102
      %p106 = scmp.eq.s32.totalorder %s24, 0
      %p107 = por %p105, %p106
      %p108 = scmp.ne.s32.totalorder %s100, %s102
      %p109 = scmp.eq.s32.totalorder %s29, 1
      %p110 = por %p108, %p109
      %p111 = scmp.ne.s32.totalorder %s102, %s103
      %p112 = scmp.eq.s32.totalorder %s29, 0
      %p113 = por %p111, %p112
      %p114 = scmp.ne.s32.totalorder %s102, %s103
      %p115 = scmp.eq.s32.totalorder %s30, 1
      %p116 = por %p114, %p115
      %p118 = scmp.ne.s32.totalorder %s103, %s117
      %p119 = scmp.eq.s32.totalorder %s30, 0
      %p120 = por %p118, %p119
      %s122 = sadd.s32 %s121, 1
      %p125 = scmp.eq.s32.totalorder %s24, 1
      %p126 = scmp.ne.s32.totalorder %s121, %s123
      %p127 = scmp.eq.s32.totalorder %s24, 0
      %p128 = por %p126, %p127
      %p129 = scmp.ne.s32.totalorder %s121, %s123
      %p130 = scmp.eq.s32.totalorder %s29, 1
      %p131 = por %p129, %p130
      %p132 = scmp.ne.s32.totalorder %s123, %s124
      %p133 = scmp.eq.s32.totalorder %s29, 0
      %p134 = por %p132, %p133
      %p135 = scmp.ne.s32.totalorder %s123, %s124
      %p136 = scmp.eq.s32.totalorder %s30, 1
      %p137 = por %p135, %p136
      %p139 = scmp.ne.s32.totalorder %s124, %s138
      %p140 = scmp.eq.s32.totalorder %s30, 0
      %p141 = por %p139, %p140
      %s143 = sadd.s32 %s142, 1
      %p146 = scmp.eq.s32.totalorder %s24, 1
      %p147 = scmp.ne.s32.totalorder %s142, %s144
      %p148 = scmp.eq.s32.totalorder %s24, 0
      %p149 = por %p147, %p148
      %p150 = scmp.ne.s32.totalorder %s142, %s144
      %p151 = scmp.eq.s32.totalorder %s29, 1
      %p152 = por %p150, %p151
      %p153 = scmp.ne.s32.totalorder %s144, %s145
      %p154 = scmp.eq.s32.totalorder %s29, 0
      %p155 = por %p153, %p154
      %p156 = scmp.ne.s32.totalorder %s144, %s145
      %p157 = scmp.eq.s32.totalorder %s30, 1
      %p158 = por %p156, %p157
      %p160 = scmp.ne.s32.totalorder %s145, %s159
      %p161 = scmp.eq.s32.totalorder %s30, 0
      %p162 = por %p160, %p161
      %s164 = sadd.s32 %s163, 1
      %p167 = scmp.eq.s32.totalorder %s24, 1
      %p168 = scmp.ne.s32.totalorder %s163, %s165
      %p169 = scmp.eq.s32.totalorder %s24, 0
      %p170 = por %p168, %p169
      %p171 = scmp.ne.s32.totalorder %s163, %s165
      %p172 = scmp.eq.s32.totalorder %s29, 1
      %p173 = por %p171, %p172
      %p174 = scmp.ne.s32.totalorder %s165, %s166
      %p175 = scmp.eq.s32.totalorder %s29, 0
      %p176 = por %p174, %p175
      %p177 = scmp.ne.s32.totalorder %s165, %s166
      %p178 = scmp.eq.s32.totalorder %s30, 1
      %p179 = por %p177, %p178
      %p181 = scmp.ne.s32.totalorder %s166, %s180
      %p182 = scmp.eq.s32.totalorder %s30, 0
      %p183 = por %p181, %p182
      %s185 = sadd.s32 %s184, 1
      %p188 = scmp.eq.s32.totalorder %s24, 1
      %p189 = scmp.ne.s32.totalorder %s184, %s186
      %p190 = scmp.eq.s32.totalorder %s24, 0
      %p191 = por %p189, %p190
      %p192 = scmp.ne.s32.totalorder %s184, %s186
      %p193 = scmp.eq.s32.totalorder %s29, 1
      %p194 = por %p192, %p193
      %p195 = scmp.ne.s32.totalorder %s186, %s187
      %p196 = scmp.eq.s32.totalorder %s29, 0
      %p197 = por %p195, %p196
      %p198 = scmp.ne.s32.totalorder %s186, %s187
      %p199 = scmp.eq.s32.totalorder %s30, 1
      %p200 = por %p198, %p199
      %p202 = scmp.ne.s32.totalorder %s187, %s201
      %p203 = scmp.eq.s32.totalorder %s30, 0
      %p204 = por %p202, %p203
      %s206 = sadd.s32 %s205, 1
      %p209 = scmp.eq.s32.totalorder %s24, 1
      %p210 = scmp.ne.s32.totalorder %s205, %s207
      %p211 = scmp.eq.s32.totalorder %s24, 0
      %p212 = por %p210, %p211
      %p213 = scmp.ne.s32.totalorder %s205, %s207
      %p214 = scmp.eq.s32.totalorder %s29, 1
      %p215 = por %p213, %p214
      %p216 = scmp.ne.s32.totalorder %s207, %s208
      %p217 = scmp.eq.s32.totalorder %s29, 0
      %p218 = por %p216, %p217
      %p219 = scmp.ne.s32.totalorder %s207, %s208
      %p220 = scmp.eq.s32.totalorder %s30, 1
      %p221 = por %p219, %p220
      %p223 = scmp.ne.s32.totalorder %s208, %s222
      %p224 = scmp.eq.s32.totalorder %s30, 0
      %p225 = por %p223, %p224
      %s227 = sadd.s32 %s226, 1
      %p230 = scmp.eq.s32.totalorder %s24, 1
      %p231 = scmp.ne.s32.totalorder %s226, %s228
      %p232 = scmp.eq.s32.totalorder %s24, 0
      %p233 = por %p231, %p232
      %p234 = scmp.ne.s32.totalorder %s226, %s228
      %p235 = scmp.eq.s32.totalorder %s29, 1
      %p236 = por %p234, %p235
      %p237 = scmp.ne.s32.totalorder %s228, %s229
      %p238 = scmp.eq.s32.totalorder %s29, 0
      %p239 = por %p237, %p238
      %p240 = scmp.ne.s32.totalorder %s228, %s229
      %p241 = scmp.eq.s32.totalorder %s30, 1
      %p242 = por %p240, %p241
      %p244 = scmp.ne.s32.totalorder %s229, %s243
      %p245 = scmp.eq.s32.totalorder %s30, 0
      %p246 = por %p244, %p245
      %s248 = sadd.s32 %s247, 1
      %p251 = scmp.eq.s32.totalorder %s24, 1
      %p252 = scmp.ne.s32.totalorder %s247, %s249
      %p253 = scmp.eq.s32.totalorder %s24, 0
      %p254 = por %p252, %p253
      %p255 = scmp.ne.s32.totalorder %s247, %s249
      %p256 = scmp.eq.s32.totalorder %s29, 1
      %p257 = por %p255, %p256
      %p258 = scmp.ne.s32.totalorder %s249, %s250
      %p259 = scmp.eq.s32.totalorder %s29, 0
      %p260 = por %p258, %p259
      %p261 = scmp.ne.s32.totalorder %s249, %s250
      %p262 = scmp.eq.s32.totalorder %s30, 1
      %p263 = por %p261, %p262
      %p265 = scmp.ne.s32.totalorder %s250, %s264
      %p266 = scmp.eq.s32.totalorder %s30, 0
      %p267 = por %p265, %p266
      %s268 = ssub.s32 %s24, %s31
      %p269 = scmp.eq.s32.totalorder %s268, 0
      %s271 = sadd.s32 %s270, 1
      %s272 = scalar_select %p269, %s270, %s271
      %p275 = pneg %p269
      %p276 = scmp.eq.s32.totalorder %s24, 1
      %p277 = por %p275, %p276
      %p278 = scmp.ne.s32.totalorder %s270, %s273
      %p279 = scmp.eq.s32.totalorder %s24, 0
      %p280 = por %p278, %p279
      %p281 = scmp.ne.s32.totalorder %s270, %s273
      %p282 = scmp.eq.s32.totalorder %s29, 1
      %p283 = por %p281, %p282
      %p284 = scmp.ne.s32.totalorder %s273, %s274
      %p285 = scmp.eq.s32.totalorder %s29, 0
      %p286 = por %p284, %p285
      %p287 = scmp.ne.s32.totalorder %s273, %s274
      %p288 = scmp.eq.s32.totalorder %s30, 1
      %p289 = por %p287, %p288
      %p291 = scmp.ne.s32.totalorder %s274, %s290
      %p292 = scmp.eq.s32.totalorder %s30, 0
      %p293 = por %p291, %p292
      %p294 = scmp.le.s32.totalorder 1, %s24
      %p295 = scmp.lt.s32.totalorder %s24, 3
      %p296 = pnand %p294, %p295
      %p297 = pneg %p296
      // Predicated region
      $region9: #{tpu_custom_call.1} parent=5 // pred_check
        _
      $region10: #{tpu_custom_call.1} parent=5 // pred_check_branch
        %299 = sbr.rel (%p296) target = $region12
      $region11: #{tpu_custom_call.1} parent=5 // pred_region
        %s300 = ssub.s32 %s24, 1
        // Predicated region
        $region13: #{tpu_custom_call.1} parent=11 // pred_check
          %p301 = pneg %p71
        $region14: #{tpu_custom_call.1} parent=11 // pred_check_branch
          %303 = sbr.rel (%p301) target = $region16
        $region15: #{tpu_custom_call.1} parent=11 // pred_region
          _
        $region16: #{tpu_custom_call.1} parent=11 // pred_fallthru
          _
        // Predicated region
        $region17: #{tpu_custom_call.1} parent=11 // pred_check
          %p304 = pneg %p92
        $region18: #{tpu_custom_call.1} parent=11 // pred_check_branch
          %306 = sbr.rel (%p304) target = $region20
        $region19: #{tpu_custom_call.1} parent=11 // pred_region
          _
        $region20: #{tpu_custom_call.1} parent=11 // pred_fallthru
          _
        // Predicated region
        $region21: #{tpu_custom_call.1} parent=11 // pred_check
          %p307 = pneg %p113
        $region22: #{tpu_custom_call.1} parent=11 // pred_check_branch
          %309 = sbr.rel (%p307) target = $region24
        $region23: #{tpu_custom_call.1} parent=11 // pred_region
          %s311 = ssub.s32 8192, 8192
          %312 = vsyncadd [#allocation4], %s311
          %s313 = sshll.u32 [#allocation3], 4
          %s314 = int_to_ptr.vmem [resolvable:$true] %s313
          %319 = dma.hbm_to_vmem [thread:$0]  %s3, 8192, %s314, [#allocation4], 128, 128, 8
        $region24: #{tpu_custom_call.1} parent=11 // pred_fallthru
          _
        // Predicated region
        $region25: #{tpu_custom_call.1} parent=11 // pred_check
          %p320 = pneg %p134
        $region26: #{tpu_custom_call.1} parent=11 // pred_check_branch
          %322 = sbr.rel (%p320) target = $region28
        $region27: #{tpu_custom_call.1} parent=11 // pred_region
          _
        $region28: #{tpu_custom_call.1} parent=11 // pred_fallthru
          _
        // Predicated region
        $region29: #{tpu_custom_call.1} parent=11 // pred_check
          %p323 = pneg %p155
        $region30: #{tpu_custom_call.1} parent=11 // pred_check_branch
          %325 = sbr.rel (%p323) target = $region32
        $region31: #{tpu_custom_call.1} parent=11 // pred_region
          %s327 = ssub.s32 2048, 2048
          %328 = vsyncadd [#allocation7], %s327
          %s329 = sshll.u32 [#allocation6], 4
          %s330 = int_to_ptr.vmem [resolvable:$true] %s329
          %335 = dma.hbm_to_vmem [thread:$0]  %s5, 2048, %s330, [#allocation7], 64, 64, 4
        $region32: #{tpu_custom_call.1} parent=11 // pred_fallthru
          _
        // Predicated region
        $region33: #{tpu_custom_call.1} parent=11 // pred_check
          %p336 = pneg %p176
        $region34: #{tpu_custom_call.1} parent=11 // pred_check_branch
          %338 = sbr.rel (%p336) target = $region36
        $region35: #{tpu_custom_call.1} parent=11 // pred_region
          _
        $region36: #{tpu_custom_call.1} parent=11 // pred_fallthru
          _
        // Predicated region
        $region37: #{tpu_custom_call.1} parent=11 // pred_check
          %p339 = pneg %p197
        $region38: #{tpu_custom_call.1} parent=11 // pred_check_branch
          %341 = sbr.rel (%p339) target = $region40
        $region39: #{tpu_custom_call.1} parent=11 // pred_region
          _
        $region40: #{tpu_custom_call.1} parent=11 // pred_fallthru
          _
        // Predicated region
        $region41: #{tpu_custom_call.1} parent=11 // pred_check
          %p342 = pneg %p218
        $region42: #{tpu_custom_call.1} parent=11 // pred_check_branch
          %344 = sbr.rel (%p342) target = $region44
        $region43: #{tpu_custom_call.1} parent=11 // pred_region
          _
        $region44: #{tpu_custom_call.1} parent=11 // pred_fallthru
          _
        // Predicated region
        $region45: #{tpu_custom_call.1} parent=11 // pred_check
          %p345 = pneg %p239
        $region46: #{tpu_custom_call.1} parent=11 // pred_check_branch
          %347 = sbr.rel (%p345) target = $region48
        $region47: #{tpu_custom_call.1} parent=11 // pred_region
          _
        $region48: #{tpu_custom_call.1} parent=11 // pred_fallthru
          _
        // Predicated region
        $region49: #{tpu_custom_call.1} parent=11 // pred_check
          %p348 = pneg %p260
        $region50: #{tpu_custom_call.1} parent=11 // pred_check_branch
          %350 = sbr.rel (%p348) target = $region52
        $region51: #{tpu_custom_call.1} parent=11 // pred_region
          _
        $region52: #{tpu_custom_call.1} parent=11 // pred_fallthru
          _
      $region12: #{tpu_custom_call.1} parent=5 // pred_fallthru
        _
      %p351 = scmp.lt.s32.totalorder %s24, 2
      // Predicated region
      $region53: #{tpu_custom_call.1} parent=5 // pred_check
        %p352 = pneg %p351
      $region54: #{tpu_custom_call.1} parent=5 // pred_check_branch
        %354 = sbr.rel (%p352) target = $region56
      $region55: #{tpu_custom_call.1} parent=5 // pred_region
        // Predicated region
        $region57: #{tpu_custom_call.1} parent=55 // pred_check
          %p355 = pneg %p44
        $region58: #{tpu_custom_call.1} parent=55 // pred_check_branch
          %357 = sbr.rel (%p355) target = $region60
        $region59: #{tpu_custom_call.1} parent=55 // pred_region
          %p358 = scmp.lt.s32.totalorder %s24, 1
          %s359 = scalar_select %p358, %s24, 1
          %s360 = smul.addr %s359, 8
          %s361 = scalar_lea.vmem %s0, %s360
        $region60: #{tpu_custom_call.1} parent=55 // pred_fallthru
          _
      $region56: #{tpu_custom_call.1} parent=5 // pred_fallthru
        _
      %p362 = scmp.le.s32.totalorder 1, %s24
      %p363 = scmp.lt.s32.totalorder %s24, 3
      %p364 = pnand %p362, %p363
      %p365 = pneg %p364
      // Predicated region
      $region61: #{tpu_custom_call.1} parent=5 // pred_check
        _
      $region62: #{tpu_custom_call.1} parent=5 // pred_check_branch
        %367 = sbr.rel (%p364) target = $region64
      $region63: #{tpu_custom_call.1} parent=5 // pred_region
        %s368 = ssub.s32 %s24, 1
        // Predicated region
        $region65: #{tpu_custom_call.1} parent=63 // pred_check
          %p369 = pneg %p113
        $region66: #{tpu_custom_call.1} parent=63 // pred_check_branch
          %371 = sbr.rel (%p369) target = $region68
        $region67: #{tpu_custom_call.1} parent=63 // pred_region
          %372 = dma.done [#allocation4], 8192
        $region68: #{tpu_custom_call.1} parent=63 // pred_fallthru
          _
        // Predicated region
        $region69: #{tpu_custom_call.1} parent=63 // pred_check
          %p373 = pneg %p155
        $region70: #{tpu_custom_call.1} parent=63 // pred_check_branch
          %375 = sbr.rel (%p373) target = $region72
        $region71: #{tpu_custom_call.1} parent=63 // pred_region
          %376 = dma.done [#allocation7], 2048
        $region72: #{tpu_custom_call.1} parent=63 // pred_fallthru
          _
        %p377 = scmp.lt.s32.totalorder %s29, 1
        %s378 = scalar_select %p377, %s29, 1
        %s379 = smul.addr %s378, 8
        %s380 = scalar_lea.vmem %s0, %s379
        %p381 = pneg %p50
        %p382 = pneg %p47
        %p383 = pneg %p71
        %p384 = pneg %p68
        %p385 = pneg %p92
        %p386 = pneg %p89
        %p387 = pneg %p113
        %p388 = pneg %p110
        %p389 = pneg %p134
        %p390 = pneg %p131
        %p391 = pneg %p155
        %p392 = pneg %p152
        %p393 = pneg %p176
        %p394 = pneg %p173
        %p395 = pneg %p197
        %p396 = pneg %p194
        %p397 = pneg %p218
        %p398 = pneg %p215
        %p399 = pneg %p239
        %p400 = pneg %p236
        %p401 = pneg %p260
        %p402 = pneg %p257
        %p403 = pneg %p286
        %p404 = pneg %p283
        %s405 = sand.u32 %s273, 1
        %s406 = scalar_lea.sflag [#allocation5], %s405
        %s407 = sand.u32 %s273, 1
        %s408 = smul.addr %s407, 8
        %s409 = scalar_lea.vmem [#allocation8], %s408
        %p410 = scmp.lt.s32.totalorder %s29, 1
        %s411 = scalar_select %p410, %s29, 1
        %s412 = smul.addr %s411, 8
        %s413 = scalar_lea.vmem %s0, %s412
        %v415 = vld [vmem:[%s413] sm:$0xff]
        %v416 = vpack.c.bf16 %v415, %v415
        %v417 = vld [vmem:[%s1] sm:$0xff]
        %v418 = vld [vmem:[%s1 + $0x8] sm:$0xff]
        %v419 = vld [vmem:[%s1 + $0x10] sm:$0xff]
        %v420 = vld [vmem:[%s1 + $0x18] sm:$0xff]
        %v421 = vld [vmem:[%s1 + $0x20] sm:$0xff]
        %v422 = vld [vmem:[%s1 + $0x28] sm:$0xff]
        %v423 = vld [vmem:[%s1 + $0x30] sm:$0xff]
        %v424 = vld [vmem:[%s1 + $0x38] sm:$0xff]
        %v425 = vld [vmem:[%s2] sm:$0xf]
        %v427 = vlaneseq
        %v428 = vshrl.u32 %v427, 7
        %v429 = vsub.s32 0, %v428
        %v430 = vrot.slane %v425, %v429
        %v431 = vlaneseq
        %v432 = vshrl.u32 %v431, 7
        %v433 = vsub.s32 1, %v432
        %v434 = vrot.slane %v425, %v433
        %v435 = vlaneseq
        %v436 = vshrl.u32 %v435, 7
        %v437 = vsub.s32 2, %v436
        %v438 = vrot.slane %v425, %v437
        %v439 = vlaneseq
        %v440 = vshrl.u32 %v439, 7
        %v441 = vsub.s32 3, %v440
        %v442 = vrot.slane %v425, %v441
        %v455 = vunpack.c.l.b16 %v417
        %v456 = vunpack.c.h.b16 %v417
        %v457 = vunpack.c.l.b16 %v418
        %v458 = vunpack.c.h.b16 %v418
        %v459 = vunpack.c.l.b16 %v419
        %v460 = vunpack.c.h.b16 %v419
        %v461 = vunpack.c.l.b16 %v420
        %v462 = vunpack.c.h.b16 %v420
        %v463 = vunpack.c.l.b16 %v421
        %v464 = vunpack.c.h.b16 %v421
        %v465 = vunpack.c.l.b16 %v422
        %v466 = vunpack.c.h.b16 %v422
        %v467 = vunpack.c.l.b16 %v423
        %v468 = vunpack.c.h.b16 %v423
        %v469 = vunpack.c.l.b16 %v424
        %v470 = vunpack.c.h.b16 %v424
        %v471 = vpack.c.b16 %v459, %v455
        %v472 = vpack.c.b16 %v460, %v456
        %v473 = vpack.c.b16 %v461, %v457
        %v474 = vpack.c.b16 %v462, %v458
        %v475 = vpack.c.b16 %v467, %v463
        %v476 = vpack.c.b16 %v468, %v464
        %v477 = vpack.c.b16 %v469, %v465
        %v478 = vpack.c.b16 %v470, %v466
        %vm487 = vcmask 261120
        %v489 = vsel %vm487, %v416, 0
        %491 = vmatprep.subr.bf16.mxu0 %v472
        %492 = vmatpush1.bf16.msra.mxu0 %v471
        %493 = vmatprep.subr.bf16.mxu0 %v476
        %494 = vmatpush1.bf16.msra.mxu0 %v475
        %495 = vmatprep.subr.bf16.mxu0 0
        %496 = vmatpush1.bf16.msra.mxu0 0
        %497 = vmatprep.subr.bf16.mxu0 0
        %498 = vmatpush1.bf16.msra.mxu0 0
        %499 = vmatprep.subr.bf16.mxu0 0
        %500 = vmatpush1.bf16.msra.mxu0 0
        %501 = vmatprep.subr.bf16.mxu0 0
        %502 = vmatpush1.bf16.msra.mxu0 0
        %503 = vmatprep.subr.bf16.mxu0 0
        %504 = vmatpush1.bf16.msra.mxu0 0
        %505 = vmatprep.subr.bf16.mxu0 0
        %506 = vmatpush1.bf16.msra.mxu0 0
        %507 = vmatprep.subr.bf16.mxu0 0
        %508 = vmatpush1.bf16.msra.mxu0 0
        %509 = vmatprep.subr.bf16.mxu0 0
        %510 = vmatpush1.bf16.msra.mxu0 0
        %511 = vmatprep.subr.bf16.mxu0 0
        %512 = vmatpush1.bf16.msra.mxu0 0
        %513 = vmatprep.subr.bf16.mxu0 0
        %514 = vmatpush1.bf16.msra.mxu0 0
        %515 = vmatprep.subr.bf16.mxu0 0
        %516 = vmatpush1.bf16.msra.mxu0 0
        %517 = vmatprep.subr.bf16.mxu0 0
        %518 = vmatpush1.bf16.msra.mxu0 0
        %519 = vmatprep.subr.bf16.mxu0 0
        %520 = vmatpush1.bf16.msra.mxu0 0
        %521 = vmatprep.subr.bf16.mxu0 0
        %522 = vmatpush1.bf16.msra.mxu0 0
        %523 = vmatprep.mubr.bf16.mxu0 0
        %524 = vmatmul.mubr.bf16.gmra.mrb[0].mxu0 %v489
        %v525 = vpop.f32.mrb[0].mxu0
        %v526 = vadd.f32 %v430, %v525
        %v527 = vpop.f32.mrb[0].mxu0
        %v528 = vadd.f32 %v434, %v527
        %v529 = vpop.f32.mrb[0].mxu0
        %v530 = vpop.f32.mrb[0].mxu0
        %531 = vdwg.mxu0
        %532 = vmatprep.subr.bf16.mxu0 %v474
        %533 = vmatpush1.bf16.msra.mxu0 %v473
        %534 = vmatprep.subr.bf16.mxu0 %v478
        %535 = vmatpush1.bf16.msra.mxu0 %v477
        %536 = vmatprep.subr.bf16.mxu0 0
        %537 = vmatpush1.bf16.msra.mxu0 0
        %538 = vmatprep.subr.bf16.mxu0 0
        %539 = vmatpush1.bf16.msra.mxu0 0
        %540 = vmatprep.subr.bf16.mxu0 0
        %541 = vmatpush1.bf16.msra.mxu0 0
        %542 = vmatprep.subr.bf16.mxu0 0
        %543 = vmatpush1.bf16.msra.mxu0 0
        %544 = vmatprep.subr.bf16.mxu0 0
        %545 = vmatpush1.bf16.msra.mxu0 0
        %546 = vmatprep.subr.bf16.mxu0 0
        %547 = vmatpush1.bf16.msra.mxu0 0
        %548 = vmatprep.subr.bf16.mxu0 0
        %549 = vmatpush1.bf16.msra.mxu0 0
        %550 = vmatprep.subr.bf16.mxu0 0
        %551 = vmatpush1.bf16.msra.mxu0 0
        %552 = vmatprep.subr.bf16.mxu0 0
        %553 = vmatpush1.bf16.msra.mxu0 0
        %554 = vmatprep.subr.bf16.mxu0 0
        %555 = vmatpush1.bf16.msra.mxu0 0
        %556 = vmatprep.subr.bf16.mxu0 0
        %557 = vmatpush1.bf16.msra.mxu0 0
        %558 = vmatprep.subr.bf16.mxu0 0
        %559 = vmatpush1.bf16.msra.mxu0 0
        %560 = vmatprep.subr.bf16.mxu0 0
        %561 = vmatpush1.bf16.msra.mxu0 0
        %562 = vmatprep.subr.bf16.mxu0 0
        %563 = vmatpush1.bf16.msra.mxu0 0
        %564 = vmatprep.mubr.bf16.mxu0 0
        %565 = vmatmul.mubr.bf16.gmra.mrb[0].mxu0 %v489
        %v566 = vpop.f32.mrb[0].mxu0
        %v567 = vadd.f32 %v438, %v566
        %v568 = vpop.f32.mrb[0].mxu0
        %v569 = vadd.f32 %v442, %v568
        %v570 = vpop.f32.mrb[0].mxu0
        %v571 = vpop.f32.mrb[0].mxu0
        %572 = vdwg.mxu0
        %v573 = vmax.f32 %v526, 0.0
        %v574 = vmax.f32 %v528, 0.0
        %v575 = vmax.f32 %v567, 0.0
        %v576 = vmax.f32 %v569, 0.0
        %v577 = vpack.c.bf16 %v573, %v573
        %v578 = vpack.c.bf16 %v574, %v574
        %v579 = vpack.c.bf16 %v575, %v575
        %v580 = vpack.c.bf16 %v576, %v576
        %v581 = vld [vmem:[#allocation3] sm:$0xff]
        %v582 = vld [vmem:[#allocation3 + $0x8] sm:$0xff]
        %v583 = vld [vmem:[#allocation3 + $0x10] sm:$0xff]
        %v584 = vld [vmem:[#allocation3 + $0x18] sm:$0xff]
        %v585 = vld [vmem:[#allocation3 + $0x20] sm:$0xff]
        %v586 = vld [vmem:[#allocation3 + $0x28] sm:$0xff]
        %v587 = vld [vmem:[#allocation3 + $0x30] sm:$0xff]
        %v588 = vld [vmem:[#allocation3 + $0x38] sm:$0xff]
        %v589 = vld [vmem:[#allocation3 + $0x40] sm:$0xff]
        %v590 = vld [vmem:[#allocation3 + $0x48] sm:$0xff]
        %v591 = vld [vmem:[#allocation3 + $0x50] sm:$0xff]
        %v592 = vld [vmem:[#allocation3 + $0x58] sm:$0xff]
        %v593 = vld [vmem:[#allocation3 + $0x60] sm:$0xff]
        %v594 = vld [vmem:[#allocation3 + $0x68] sm:$0xff]
        %v595 = vld [vmem:[#allocation3 + $0x70] sm:$0xff]
        %v596 = vld [vmem:[#allocation3 + $0x78] sm:$0xff]
        %v597 = vld [vmem:[#allocation3 + $0x80] sm:$0xff]
        %v598 = vld [vmem:[#allocation3 + $0x88] sm:$0xff]
        %v599 = vld [vmem:[#allocation3 + $0x90] sm:$0xff]
        %v600 = vld [vmem:[#allocation3 + $0x98] sm:$0xff]
        %v601 = vld [vmem:[#allocation3 + $0xa0] sm:$0xff]
        %v602 = vld [vmem:[#allocation3 + $0xa8] sm:$0xff]
        %v603 = vld [vmem:[#allocation3 + $0xb0] sm:$0xff]
        %v604 = vld [vmem:[#allocation3 + $0xb8] sm:$0xff]
        %v605 = vld [vmem:[#allocation3 + $0xc0] sm:$0xff]
        %v606 = vld [vmem:[#allocation3 + $0xc8] sm:$0xff]
        %v607 = vld [vmem:[#allocation3 + $0xd0] sm:$0xff]
        %v608 = vld [vmem:[#allocation3 + $0xd8] sm:$0xff]
        %v609 = vld [vmem:[#allocation3 + $0xe0] sm:$0xff]
        %v610 = vld [vmem:[#allocation3 + $0xe8] sm:$0xff]
        %v611 = vld [vmem:[#allocation3 + $0xf0] sm:$0xff]
        %v612 = vld [vmem:[#allocation3 + $0xf8] sm:$0xff]
        %v613 = vld [vmem:[#allocation3 + $0x100] sm:$0xff]
        %v614 = vld [vmem:[#allocation3 + $0x108] sm:$0xff]
        %v615 = vld [vmem:[#allocation3 + $0x110] sm:$0xff]
        %v616 = vld [vmem:[#allocation3 + $0x118] sm:$0xff]
        %v617 = vld [vmem:[#allocation3 + $0x120] sm:$0xff]
        %v618 = vld [vmem:[#allocation3 + $0x128] sm:$0xff]
        %v619 = vld [vmem:[#allocation3 + $0x130] sm:$0xff]
        %v620 = vld [vmem:[#allocation3 + $0x138] sm:$0xff]
        %v621 = vld [vmem:[#allocation3 + $0x140] sm:$0xff]
        %v622 = vld [vmem:[#allocation3 + $0x148] sm:$0xff]
        %v623 = vld [vmem:[#allocation3 + $0x150] sm:$0xff]
        %v624 = vld [vmem:[#allocation3 + $0x158] sm:$0xff]
        %v625 = vld [vmem:[#allocation3 + $0x160] sm:$0xff]
        %v626 = vld [vmem:[#allocation3 + $0x168] sm:$0xff]
        %v627 = vld [vmem:[#allocation3 + $0x170] sm:$0xff]
        %v628 = vld [vmem:[#allocation3 + $0x178] sm:$0xff]
        %v629 = vld [vmem:[#allocation3 + $0x180] sm:$0xff]
        %v630 = vld [vmem:[#allocation3 + $0x188] sm:$0xff]
        %v631 = vld [vmem:[#allocation3 + $0x190] sm:$0xff]
        %v632 = vld [vmem:[#allocation3 + $0x198] sm:$0xff]
        %v633 = vld [vmem:[#allocation3 + $0x1a0] sm:$0xff]
        %v634 = vld [vmem:[#allocation3 + $0x1a8] sm:$0xff]
        %v635 = vld [vmem:[#allocation3 + $0x1b0] sm:$0xff]
        %v636 = vld [vmem:[#allocation3 + $0x1b8] sm:$0xff]
        %v637 = vld [vmem:[#allocation3 + $0x1c0] sm:$0xff]
        %v638 = vld [vmem:[#allocation3 + $0x1c8] sm:$0xff]
        %v639 = vld [vmem:[#allocation3 + $0x1d0] sm:$0xff]
        %v640 = vld [vmem:[#allocation3 + $0x1d8] sm:$0xff]
        %v641 = vld [vmem:[#allocation3 + $0x1e0] sm:$0xff]
        %v642 = vld [vmem:[#allocation3 + $0x1e8] sm:$0xff]
        %v643 = vld [vmem:[#allocation3 + $0x1f0] sm:$0xff]
        %v644 = vld [vmem:[#allocation3 + $0x1f8] sm:$0xff]
        %v645 = vld [vmem:[%s4] sm:$0x3]
        %v647 = vlaneseq
        %v648 = vshrl.u32 %v647, 7
        %v649 = vsub.s32 0, %v648
        %v650 = vrot.slane %v645, %v649
        %v651 = vlaneseq
        %v652 = vshrl.u32 %v651, 7
        %v653 = vsub.s32 1, %v652
        %v654 = vrot.slane %v645, %v653
        %v721 = vunpack.c.l.b16 %v581
        %v722 = vunpack.c.h.b16 %v581
        %v723 = vunpack.c.l.b16 %v582
        %v724 = vunpack.c.h.b16 %v582
        %v725 = vunpack.c.l.b16 %v583
        %v726 = vunpack.c.h.b16 %v583
        %v727 = vunpack.c.l.b16 %v584
        %v728 = vunpack.c.h.b16 %v584
        %v729 = vunpack.c.l.b16 %v585
        %v730 = vunpack.c.h.b16 %v585
        %v731 = vunpack.c.l.b16 %v586
        %v732 = vunpack.c.h.b16 %v586
        %v733 = vunpack.c.l.b16 %v587
        %v734 = vunpack.c.h.b16 %v587
        %v735 = vunpack.c.l.b16 %v588
        %v736 = vunpack.c.h.b16 %v588
        %v737 = vunpack.c.l.b16 %v589
        %v738 = vunpack.c.h.b16 %v589
        %v739 = vunpack.c.l.b16 %v590
        %v740 = vunpack.c.h.b16 %v590
        %v741 = vunpack.c.l.b16 %v591
        %v742 = vunpack.c.h.b16 %v591
        %v743 = vunpack.c.l.b16 %v592
        %v744 = vunpack.c.h.b16 %v592
        %v745 = vunpack.c.l.b16 %v593
        %v746 = vunpack.c.h.b16 %v593
        %v747 = vunpack.c.l.b16 %v594
        %v748 = vunpack.c.h.b16 %v594
        %v749 = vunpack.c.l.b16 %v595
        %v750 = vunpack.c.h.b16 %v595
        %v751 = vunpack.c.l.b16 %v596
        %v752 = vunpack.c.h.b16 %v596
        %v753 = vunpack.c.l.b16 %v597
        %v754 = vunpack.c.h.b16 %v597
        %v755 = vunpack.c.l.b16 %v598
        %v756 = vunpack.c.h.b16 %v598
        %v757 = vunpack.c.l.b16 %v599
        %v758 = vunpack.c.h.b16 %v599
        %v759 = vunpack.c.l.b16 %v600
        %v760 = vunpack.c.h.b16 %v600
        %v761 = vunpack.c.l.b16 %v601
        %v762 = vunpack.c.h.b16 %v601
        %v763 = vunpack.c.l.b16 %v602
        %v764 = vunpack.c.h.b16 %v602
        %v765 = vunpack.c.l.b16 %v603
        %v766 = vunpack.c.h.b16 %v603
        %v767 = vunpack.c.l.b16 %v604
        %v768 = vunpack.c.h.b16 %v604
        %v769 = vunpack.c.l.b16 %v605
        %v770 = vunpack.c.h.b16 %v605
        %v771 = vunpack.c.l.b16 %v606
        %v772 = vunpack.c.h.b16 %v606
        %v773 = vunpack.c.l.b16 %v607
        %v774 = vunpack.c.h.b16 %v607
        %v775 = vunpack.c.l.b16 %v608
        %v776 = vunpack.c.h.b16 %v608
        %v777 = vunpack.c.l.b16 %v609
        %v778 = vunpack.c.h.b16 %v609
        %v779 = vunpack.c.l.b16 %v610
        %v780 = vunpack.c.h.b16 %v610
        %v781 = vunpack.c.l.b16 %v611
        %v782 = vunpack.c.h.b16 %v611
        %v783 = vunpack.c.l.b16 %v612
        %v784 = vunpack.c.h.b16 %v612
        %v785 = vunpack.c.l.b16 %v613
        %v786 = vunpack.c.h.b16 %v613
        %v787 = vunpack.c.l.b16 %v614
        %v788 = vunpack.c.h.b16 %v614
        %v789 = vunpack.c.l.b16 %v615
        %v790 = vunpack.c.h.b16 %v615
        %v791 = vunpack.c.l.b16 %v616
        %v792 = vunpack.c.h.b16 %v616
        %v793 = vunpack.c.l.b16 %v617
        %v794 = vunpack.c.h.b16 %v617
        %v795 = vunpack.c.l.b16 %v618
        %v796 = vunpack.c.h.b16 %v618
        %v797 = vunpack.c.l.b16 %v619
        %v798 = vunpack.c.h.b16 %v619
        %v799 = vunpack.c.l.b16 %v620
        %v800 = vunpack.c.h.b16 %v620
        %v801 = vunpack.c.l.b16 %v621
        %v802 = vunpack.c.h.b16 %v621
        %v803 = vunpack.c.l.b16 %v622
        %v804 = vunpack.c.h.b16 %v622
        %v805 = vunpack.c.l.b16 %v623
        %v806 = vunpack.c.h.b16 %v623
        %v807 = vunpack.c.l.b16 %v624
        %v808 = vunpack.c.h.b16 %v624
        %v809 = vunpack.c.l.b16 %v625
        %v810 = vunpack.c.h.b16 %v625
        %v811 = vunpack.c.l.b16 %v626
        %v812 = vunpack.c.h.b16 %v626
        %v813 = vunpack.c.l.b16 %v627
        %v814 = vunpack.c.h.b16 %v627
        %v815 = vunpack.c.l.b16 %v628
        %v816 = vunpack.c.h.b16 %v628
        %v817 = vunpack.c.l.b16 %v629
        %v818 = vunpack.c.h.b16 %v629
        %v819 = vunpack.c.l.b16 %v630
        %v820 = vunpack.c.h.b16 %v630
        %v821 = vunpack.c.l.b16 %v631
        %v822 = vunpack.c.h.b16 %v631
        %v823 = vunpack.c.l.b16 %v632
        %v824 = vunpack.c.h.b16 %v632
        %v825 = vunpack.c.l.b16 %v633
        %v826 = vunpack.c.h.b16 %v633
        %v827 = vunpack.c.l.b16 %v634
        %v828 = vunpack.c.h.b16 %v634
        %v829 = vunpack.c.l.b16 %v635
        %v830 = vunpack.c.h.b16 %v635
        %v831 = vunpack.c.l.b16 %v636
        %v832 = vunpack.c.h.b16 %v636
        %v833 = vunpack.c.l.b16 %v637
        %v834 = vunpack.c.h.b16 %v637
        %v835 = vunpack.c.l.b16 %v638
        %v836 = vunpack.c.h.b16 %v638
        %v837 = vunpack.c.l.b16 %v639
        %v838 = vunpack.c.h.b16 %v639
        %v839 = vunpack.c.l.b16 %v640
        %v840 = vunpack.c.h.b16 %v640
        %v841 = vunpack.c.l.b16 %v641
        %v842 = vunpack.c.h.b16 %v641
        %v843 = vunpack.c.l.b16 %v642
        %v844 = vunpack.c.h.b16 %v642
        %v845 = vunpack.c.l.b16 %v643
        %v846 = vunpack.c.h.b16 %v643
        %v847 = vunpack.c.l.b16 %v644
        %v848 = vunpack.c.h.b16 %v644
        %v849 = vpack.c.b16 %v723, %v721
        %v850 = vpack.c.b16 %v724, %v722
        %v851 = vpack.c.b16 %v727, %v725
        %v852 = vpack.c.b16 %v728, %v726
        %v853 = vpack.c.b16 %v731, %v729
        %v854 = vpack.c.b16 %v732, %v730
        %v855 = vpack.c.b16 %v735, %v733
        %v856 = vpack.c.b16 %v736, %v734
        %v857 = vpack.c.b16 %v739, %v737
        %v858 = vpack.c.b16 %v740, %v738
        %v859 = vpack.c.b16 %v743, %v741
        %v860 = vpack.c.b16 %v744, %v742
        %v861 = vpack.c.b16 %v747, %v745
        %v862 = vpack.c.b16 %v748, %v746
        %v863 = vpack.c.b16 %v751, %v749
        %v864 = vpack.c.b16 %v752, %v750
        %v865 = vpack.c.b16 %v755, %v753
        %v866 = vpack.c.b16 %v756, %v754
        %v867 = vpack.c.b16 %v759, %v757
        %v868 = vpack.c.b16 %v760, %v758
        %v869 = vpack.c.b16 %v763, %v761
        %v870 = vpack.c.b16 %v764, %v762
        %v871 = vpack.c.b16 %v767, %v765
        %v872 = vpack.c.b16 %v768, %v766
        %v873 = vpack.c.b16 %v771, %v769
        %v874 = vpack.c.b16 %v772, %v770
        %v875 = vpack.c.b16 %v775, %v773
        %v876 = vpack.c.b16 %v776, %v774
        %v877 = vpack.c.b16 %v779, %v777
        %v878 = vpack.c.b16 %v780, %v778
        %v879 = vpack.c.b16 %v783, %v781
        %v880 = vpack.c.b16 %v784, %v782
        %v881 = vpack.c.b16 %v787, %v785
        %v882 = vpack.c.b16 %v788, %v786
        %v883 = vpack.c.b16 %v791, %v789
        %v884 = vpack.c.b16 %v792, %v790
        %v885 = vpack.c.b16 %v795, %v793
        %v886 = vpack.c.b16 %v796, %v794
        %v887 = vpack.c.b16 %v799, %v797
        %v888 = vpack.c.b16 %v800, %v798
        %v889 = vpack.c.b16 %v803, %v801
        %v890 = vpack.c.b16 %v804, %v802
        %v891 = vpack.c.b16 %v807, %v805
        %v892 = vpack.c.b16 %v808, %v806
        %v893 = vpack.c.b16 %v811, %v809
        %v894 = vpack.c.b16 %v812, %v810
        %v895 = vpack.c.b16 %v815, %v813
        %v896 = vpack.c.b16 %v816, %v814
        %v897 = vpack.c.b16 %v819, %v817
        %v898 = vpack.c.b16 %v820, %v818
        %v899 = vpack.c.b16 %v823, %v821
        %v900 = vpack.c.b16 %v824, %v822
        %v901 = vpack.c.b16 %v827, %v825
        %v902 = vpack.c.b16 %v828, %v826
        %v903 = vpack.c.b16 %v831, %v829
        %v904 = vpack.c.b16 %v832, %v830
        %v905 = vpack.c.b16 %v835, %v833
        %v906 = vpack.c.b16 %v836, %v834
        %v907 = vpack.c.b16 %v839, %v837
        %v908 = vpack.c.b16 %v840, %v838
        %v909 = vpack.c.b16 %v843, %v841
        %v910 = vpack.c.b16 %v844, %v842
        %v911 = vpack.c.b16 %v847, %v845
        %v912 = vpack.c.b16 %v848, %v846
        %977 = vmatprep.subr.bf16.mxu0 %v850
        %978 = vmatpush1.bf16.msra.mxu0 %v849
        %979 = vmatprep.subr.bf16.mxu0 %v852
        %980 = vmatpush1.bf16.msra.mxu0 %v851
        %981 = vmatprep.subr.bf16.mxu0 %v854
        %982 = vmatpush1.bf16.msra.mxu0 %v853
        %983 = vmatprep.subr.bf16.mxu0 %v856
        %984 = vmatpush1.bf16.msra.mxu0 %v855
        %985 = vmatprep.subr.bf16.mxu0 %v858
        %986 = vmatpush1.bf16.msra.mxu0 %v857
        %987 = vmatprep.subr.bf16.mxu0 %v860
        %988 = vmatpush1.bf16.msra.mxu0 %v859
        %989 = vmatprep.subr.bf16.mxu0 %v862
        %990 = vmatpush1.bf16.msra.mxu0 %v861
        %991 = vmatprep.subr.bf16.mxu0 %v864
        %992 = vmatpush1.bf16.msra.mxu0 %v863
        %993 = vmatprep.subr.bf16.mxu0 %v866
        %994 = vmatpush1.bf16.msra.mxu0 %v865
        %995 = vmatprep.subr.bf16.mxu0 %v868
        %996 = vmatpush1.bf16.msra.mxu0 %v867
        %997 = vmatprep.subr.bf16.mxu0 %v870
        %998 = vmatpush1.bf16.msra.mxu0 %v869
        %999 = vmatprep.subr.bf16.mxu0 %v872
        %1000 = vmatpush1.bf16.msra.mxu0 %v871
        %1001 = vmatprep.subr.bf16.mxu0 %v874
        %1002 = vmatpush1.bf16.msra.mxu0 %v873
        %1003 = vmatprep.subr.bf16.mxu0 %v876
        %1004 = vmatpush1.bf16.msra.mxu0 %v875
        %1005 = vmatprep.subr.bf16.mxu0 %v878
        %1006 = vmatpush1.bf16.msra.mxu0 %v877
        %1007 = vmatprep.subr.bf16.mxu0 %v880
        %1008 = vmatpush1.bf16.msra.mxu0 %v879
        %1009 = vmatprep.mubr.bf16.mxu0 %v578
        %1010 = vmatmul.mubr.bf16.gmra.mrb[0].mxu0 %v577
        %v1011 = vpop.f32.mrb[0].mxu0
        %v1012 = vadd.f32 %v650, %v1011
        %v1013 = vpop.f32.mrb[0].mxu0
        %v1014 = vadd.f32 %v654, %v1013
        %v1015 = vpop.f32.mrb[0].mxu0
        %v1016 = vpop.f32.mrb[0].mxu0
        %1017 = vdwg.mxu0
        %1018 = vmatprep.subr.bf16.mxu0 %v882
        %1019 = vmatpush1.bf16.msra.mxu0 %v881
        %1020 = vmatprep.subr.bf16.mxu0 %v884
        %1021 = vmatpush1.bf16.msra.mxu0 %v883
        %1022 = vmatprep.subr.bf16.mxu0 %v886
        %1023 = vmatpush1.bf16.msra.mxu0 %v885
        %1024 = vmatprep.subr.bf16.mxu0 %v888
        %1025 = vmatpush1.bf16.msra.mxu0 %v887
        %1026 = vmatprep.subr.bf16.mxu0 %v890
        %1027 = vmatpush1.bf16.msra.mxu0 %v889
        %1028 = vmatprep.subr.bf16.mxu0 %v892
        %1029 = vmatpush1.bf16.msra.mxu0 %v891
        %1030 = vmatprep.subr.bf16.mxu0 %v894
        %1031 = vmatpush1.bf16.msra.mxu0 %v893
        %1032 = vmatprep.subr.bf16.mxu0 %v896
        %1033 = vmatpush1.bf16.msra.mxu0 %v895
        %1034 = vmatprep.subr.bf16.mxu0 %v898
        %1035 = vmatpush1.bf16.msra.mxu0 %v897
        %1036 = vmatprep.subr.bf16.mxu0 %v900
        %1037 = vmatpush1.bf16.msra.mxu0 %v899
        %1038 = vmatprep.subr.bf16.mxu0 %v902
        %1039 = vmatpush1.bf16.msra.mxu0 %v901
        %1040 = vmatprep.subr.bf16.mxu0 %v904
        %1041 = vmatpush1.bf16.msra.mxu0 %v903
        %1042 = vmatprep.subr.bf16.mxu0 %v906
        %1043 = vmatpush1.bf16.msra.mxu0 %v905
        %1044 = vmatprep.subr.bf16.mxu0 %v908
        %1045 = vmatpush1.bf16.msra.mxu0 %v907
        %1046 = vmatprep.subr.bf16.mxu0 %v910
        %1047 = vmatpush1.bf16.msra.mxu0 %v909
        %1048 = vmatprep.subr.bf16.mxu0 %v912
        %1049 = vmatpush1.bf16.msra.mxu0 %v911
        %1050 = vmatprep.mubr.bf16.mxu0 %v580
        %1051 = vmatmul.mubr.bf16.gmra.mrb[0].mxu0 %v579
        %v1052 = vpop.f32.mrb[0].mxu0
        %v1053 = vadd.f32 %v1012, %v1052
        %v1054 = vpop.f32.mrb[0].mxu0
        %v1055 = vadd.f32 %v1014, %v1054
        %v1056 = vpop.f32.mrb[0].mxu0
        %v1057 = vpop.f32.mrb[0].mxu0
        %1058 = vdwg.mxu0
        %v1059 = vmax.f32 %v1053, 0.0
        %v1060 = vmax.f32 %v1055, 0.0
        %v1061 = vpack.c.bf16 %v1059, %v1059
        %v1062 = vpack.c.bf16 %v1060, %v1060
        %v1063 = vld [vmem:[#allocation6] sm:$0xf]
        %v1064 = vld [vmem:[#allocation6 + $0x4] sm:$0xf]
        %v1065 = vld [vmem:[#allocation6 + $0x8] sm:$0xf]
        %v1066 = vld [vmem:[#allocation6 + $0xc] sm:$0xf]
        %v1067 = vld [vmem:[#allocation6 + $0x10] sm:$0xf]
        %v1068 = vld [vmem:[#allocation6 + $0x14] sm:$0xf]
        %v1069 = vld [vmem:[#allocation6 + $0x18] sm:$0xf]
        %v1070 = vld [vmem:[#allocation6 + $0x1c] sm:$0xf]
        %v1071 = vld [vmem:[#allocation6 + $0x20] sm:$0xf]
        %v1072 = vld [vmem:[#allocation6 + $0x24] sm:$0xf]
        %v1073 = vld [vmem:[#allocation6 + $0x28] sm:$0xf]
        %v1074 = vld [vmem:[#allocation6 + $0x2c] sm:$0xf]
        %v1075 = vld [vmem:[#allocation6 + $0x30] sm:$0xf]
        %v1076 = vld [vmem:[#allocation6 + $0x34] sm:$0xf]
        %v1077 = vld [vmem:[#allocation6 + $0x38] sm:$0xf]
        %v1078 = vld [vmem:[#allocation6 + $0x3c] sm:$0xf]
        %v1079 = vld [vmem:[#allocation6 + $0x40] sm:$0xf]
        %v1080 = vld [vmem:[#allocation6 + $0x44] sm:$0xf]
        %v1081 = vld [vmem:[#allocation6 + $0x48] sm:$0xf]
        %v1082 = vld [vmem:[#allocation6 + $0x4c] sm:$0xf]
        %v1083 = vld [vmem:[#allocation6 + $0x50] sm:$0xf]
        %v1084 = vld [vmem:[#allocation6 + $0x54] sm:$0xf]
        %v1085 = vld [vmem:[#allocation6 + $0x58] sm:$0xf]
        %v1086 = vld [vmem:[#allocation6 + $0x5c] sm:$0xf]
        %v1087 = vld [vmem:[#allocation6 + $0x60] sm:$0xf]
        %v1088 = vld [vmem:[#allocation6 + $0x64] sm:$0xf]
        %v1089 = vld [vmem:[#allocation6 + $0x68] sm:$0xf]
        %v1090 = vld [vmem:[#allocation6 + $0x6c] sm:$0xf]
        %v1091 = vld [vmem:[#allocation6 + $0x70] sm:$0xf]
        %v1092 = vld [vmem:[#allocation6 + $0x74] sm:$0xf]
        %v1093 = vld [vmem:[#allocation6 + $0x78] sm:$0xf]
        %v1094 = vld [vmem:[#allocation6 + $0x7c] sm:$0xf]
        %v1095 = vld [vmem:[%s6] sm:$0x1]
        %v1097 = vlaneseq
        %v1098 = vshrl.u32 %v1097, 7
        %v1099 = vsub.s32 0, %v1098
        %v1100 = vrot.slane %v1095, %v1099
        %v1134 = vunpack.c.l.b16 %v1063
        %v1135 = vunpack.c.l.b16 %v1064
        %v1136 = vunpack.c.l.b16 %v1065
        %v1137 = vunpack.c.l.b16 %v1066
        %v1138 = vunpack.c.l.b16 %v1067
        %v1139 = vunpack.c.l.b16 %v1068
        %v1140 = vunpack.c.l.b16 %v1069
        %v1141 = vunpack.c.l.b16 %v1070
        %v1142 = vunpack.c.l.b16 %v1071
        %v1143 = vunpack.c.l.b16 %v1072
        %v1144 = vunpack.c.l.b16 %v1073
        %v1145 = vunpack.c.l.b16 %v1074
        %v1146 = vunpack.c.l.b16 %v1075
        %v1147 = vunpack.c.l.b16 %v1076
        %v1148 = vunpack.c.l.b16 %v1077
        %v1149 = vunpack.c.l.b16 %v1078
        %v1150 = vunpack.c.l.b16 %v1079
        %v1151 = vunpack.c.l.b16 %v1080
        %v1152 = vunpack.c.l.b16 %v1081
        %v1153 = vunpack.c.l.b16 %v1082
        %v1154 = vunpack.c.l.b16 %v1083
        %v1155 = vunpack.c.l.b16 %v1084
        %v1156 = vunpack.c.l.b16 %v1085
        %v1157 = vunpack.c.l.b16 %v1086
        %v1158 = vunpack.c.l.b16 %v1087
        %v1159 = vunpack.c.l.b16 %v1088
        %v1160 = vunpack.c.l.b16 %v1089
        %v1161 = vunpack.c.l.b16 %v1090
        %v1162 = vunpack.c.l.b16 %v1091
        %v1163 = vunpack.c.l.b16 %v1092
        %v1164 = vunpack.c.l.b16 %v1093
        %v1165 = vunpack.c.l.b16 %v1094
        %v1166 = vpack.c.b16 %v1135, %v1134
        %v1167 = vpack.c.b16 %v1137, %v1136
        %v1168 = vpack.c.b16 %v1139, %v1138
        %v1169 = vpack.c.b16 %v1141, %v1140
        %v1170 = vpack.c.b16 %v1143, %v1142
        %v1171 = vpack.c.b16 %v1145, %v1144
        %v1172 = vpack.c.b16 %v1147, %v1146
        %v1173 = vpack.c.b16 %v1149, %v1148
        %v1174 = vpack.c.b16 %v1151, %v1150
        %v1175 = vpack.c.b16 %v1153, %v1152
        %v1176 = vpack.c.b16 %v1155, %v1154
        %v1177 = vpack.c.b16 %v1157, %v1156
        %v1178 = vpack.c.b16 %v1159, %v1158
        %v1179 = vpack.c.b16 %v1161, %v1160
        %v1180 = vpack.c.b16 %v1163, %v1162
        %v1181 = vpack.c.b16 %v1165, %v1164
        %1198 = vmatprep.subr.bf16.mxu0 0
        %1199 = vmatpush1.bf16.msra.mxu0 %v1166
        %1200 = vmatprep.subr.bf16.mxu0 0
        %1201 = vmatpush1.bf16.msra.mxu0 %v1167
        %1202 = vmatprep.subr.bf16.mxu0 0
        %1203 = vmatpush1.bf16.msra.mxu0 %v1168
        %1204 = vmatprep.subr.bf16.mxu0 0
        %1205 = vmatpush1.bf16.msra.mxu0 %v1169
        %1206 = vmatprep.subr.bf16.mxu0 0
        %1207 = vmatpush1.bf16.msra.mxu0 %v1170
        %1208 = vmatprep.subr.bf16.mxu0 0
        %1209 = vmatpush1.bf16.msra.mxu0 %v1171
        %1210 = vmatprep.subr.bf16.mxu0 0
        %1211 = vmatpush1.bf16.msra.mxu0 %v1172
        %1212 = vmatprep.subr.bf16.mxu0 0
        %1213 = vmatpush1.bf16.msra.mxu0 %v1173
        %1214 = vmatprep.subr.bf16.mxu0 0
        %1215 = vmatpush1.bf16.msra.mxu0 %v1174
        %1216 = vmatprep.subr.bf16.mxu0 0
        %1217 = vmatpush1.bf16.msra.mxu0 %v1175
        %1218 = vmatprep.subr.bf16.mxu0 0
        %1219 = vmatpush1.bf16.msra.mxu0 %v1176
        %1220 = vmatprep.subr.bf16.mxu0 0
        %1221 = vmatpush1.bf16.msra.mxu0 %v1177
        %1222 = vmatprep.subr.bf16.mxu0 0
        %1223 = vmatpush1.bf16.msra.mxu0 %v1178
        %1224 = vmatprep.subr.bf16.mxu0 0
        %1225 = vmatpush1.bf16.msra.mxu0 %v1179
        %1226 = vmatprep.subr.bf16.mxu0 0
        %1227 = vmatpush1.bf16.msra.mxu0 %v1180
        %1228 = vmatprep.subr.bf16.mxu0 0
        %1229 = vmatpush1.bf16.msra.mxu0 %v1181
        %1230 = vmatprep.mubr.bf16.mxu0 %v1062
        %1231 = vmatmul.mubr.bf16.gmra.mrb[0].mxu0 %v1061
        %v1232 = vpop.f32.mrb[0].mxu0
        %v1233 = vadd.f32 %v1100, %v1232
        %v1234 = vpop.f32.mrb[0].mxu0
        %v1235 = vpop.f32.mrb[0].mxu0
        %v1236 = vpop.f32.mrb[0].mxu0
        %1237 = vdwg.mxu0
        %v1238 = vmax.f32 %v1233, 0.0
        %v1239 = vpack.c.bf16 %v1238, %v1238
        %v1240 = vld [vmem:[%s7] sm:$0xf]
        %v1241 = vld [vmem:[%s7 + $0x4] sm:$0xf]
        %v1242 = vld [vmem:[%s7 + $0x8] sm:$0xf]
        %v1243 = vld [vmem:[%s7 + $0xc] sm:$0xf]
        %v1244 = vld [vmem:[%s7 + $0x10] sm:$0xf]
        %v1245 = vld [vmem:[%s7 + $0x14] sm:$0xf]
        %v1246 = vld [vmem:[%s7 + $0x18] sm:$0xf]
        %v1247 = vld [vmem:[%s7 + $0x1c] sm:$0xf]
        %v1248 = vld [vmem:[%s7 + $0x20] sm:$0xf]
        %v1249 = vld [vmem:[%s7 + $0x24] sm:$0xf]
        %v1250 = vld [vmem:[%s7 + $0x28] sm:$0xf]
        %v1251 = vld [vmem:[%s7 + $0x2c] sm:$0xf]
        %v1252 = vld [vmem:[%s7 + $0x30] sm:$0xf]
        %v1253 = vld [vmem:[%s7 + $0x34] sm:$0xf]
        %v1254 = vld [vmem:[%s7 + $0x38] sm:$0xf]
        %v1255 = vld [vmem:[%s7 + $0x3c] sm:$0xf]
        %v1256 = vld [vmem:[%s8] sm:$0x1]
        %v1258 = vlaneseq
        %v1259 = vshrl.u32 %v1258, 7
        %v1260 = vsub.s32 0, %v1259
        %v1261 = vrot.slane %v1256, %v1260
        %v1279 = vunpack.c.l.b16 %v1240
        %v1280 = vunpack.c.l.b16 %v1241
        %v1281 = vunpack.c.l.b16 %v1242
        %v1282 = vunpack.c.l.b16 %v1243
        %v1283 = vunpack.c.l.b16 %v1244
        %v1284 = vunpack.c.l.b16 %v1245
        %v1285 = vunpack.c.l.b16 %v1246
        %v1286 = vunpack.c.l.b16 %v1247
        %v1287 = vunpack.c.l.b16 %v1248
        %v1288 = vunpack.c.l.b16 %v1249
        %v1289 = vunpack.c.l.b16 %v1250
        %v1290 = vunpack.c.l.b16 %v1251
        %v1291 = vunpack.c.l.b16 %v1252
        %v1292 = vunpack.c.l.b16 %v1253
        %v1293 = vunpack.c.l.b16 %v1254
        %v1294 = vunpack.c.l.b16 %v1255
        %v1295 = vpack.c.b16 %v1280, %v1279
        %v1296 = vpack.c.b16 %v1282, %v1281
        %v1297 = vpack.c.b16 %v1284, %v1283
        %v1298 = vpack.c.b16 %v1286, %v1285
        %v1299 = vpack.c.b16 %v1288, %v1287
        %v1300 = vpack.c.b16 %v1290, %v1289
        %v1301 = vpack.c.b16 %v1292, %v1291
        %v1302 = vpack.c.b16 %v1294, %v1293
        %1311 = vmatprep.subr.bf16.mxu0 0
        %1312 = vmatpush1.bf16.msra.mxu0 %v1295
        %1313 = vmatprep.subr.bf16.mxu0 0
        %1314 = vmatpush1.bf16.msra.mxu0 %v1296
        %1315 = vmatprep.subr.bf16.mxu0 0
        %1316 = vmatpush1.bf16.msra.mxu0 %v1297
        %1317 = vmatprep.subr.bf16.mxu0 0
        %1318 = vmatpush1.bf16.msra.mxu0 %v1298
        %1319 = vmatprep.subr.bf16.mxu0 0
        %1320 = vmatpush1.bf16.msra.mxu0 %v1299
        %1321 = vmatprep.subr.bf16.mxu0 0
        %1322 = vmatpush1.bf16.msra.mxu0 %v1300
        %1323 = vmatprep.subr.bf16.mxu0 0
        %1324 = vmatpush1.bf16.msra.mxu0 %v1301
        %1325 = vmatprep.subr.bf16.mxu0 0
        %1326 = vmatpush1.bf16.msra.mxu0 %v1302
        %1327 = vmatprep.subr.bf16.mxu0 0
        %1328 = vmatpush1.bf16.msra.mxu0 0
        %1329 = vmatprep.subr.bf16.mxu0 0
        %1330 = vmatpush1.bf16.msra.mxu0 0
        %1331 = vmatprep.subr.bf16.mxu0 0
        %1332 = vmatpush1.bf16.msra.mxu0 0
        %1333 = vmatprep.subr.bf16.mxu0 0
        %1334 = vmatpush1.bf16.msra.mxu0 0
        %1335 = vmatprep.subr.bf16.mxu0 0
        %1336 = vmatpush1.bf16.msra.mxu0 0
        %1337 = vmatprep.subr.bf16.mxu0 0
        %1338 = vmatpush1.bf16.msra.mxu0 0
        %1339 = vmatprep.subr.bf16.mxu0 0
        %1340 = vmatpush1.bf16.msra.mxu0 0
        %1341 = vmatprep.subr.bf16.mxu0 0
        %1342 = vmatpush1.bf16.msra.mxu0 0
        %1343 = vmatprep.mubr.bf16.mxu0 0
        %1344 = vmatmul.mubr.bf16.gmra.mrb[0].mxu0 %v1239
        %v1345 = vpop.f32.mrb[0].mxu0
        %v1346 = vadd.f32 %v1261, %v1345
        %v1347 = vpop.f32.mrb[0].mxu0
        %v1348 = vpop.f32.mrb[0].mxu0
        %v1349 = vpop.f32.mrb[0].mxu0
        %1350 = vdwg.mxu0
        %v1351 = vmax.f32 %v1346, 0.0
        %v1352 = vld [vmem:[%s9] sm:$0x1]
        %v1354 = vlaneseq
        %v1355 = vshrl.u32 %v1354, 7
        %v1356 = vsub.s32 0, %v1355
        %v1357 = vrot.slane %v1352, %v1356
        %v1359 = vmul.f32 %v1351, %v1357
        %vm1360 = vcmask 523264
        %v1361 = vsel %vm1360, %v1359, 0.0
        %1362 = vadd.xlane.f32.xlu0 %v1361
        %v1363 = vpop.xlane.xlu0 %1362
        %v1364 = vld [vmem:[#allocation2] sm:$0x1]
        %v1366 = vlaneseq
        %v1367 = vshrl.u32 %v1366, 7
        %v1368 = vsub.s32 0, %v1367
        %v1369 = vrot.slane %v1364, %v1368
        %v1371 = vadd.f32 %v1363, %v1369
        %1373 = vset.pattern.permute.xlu0 0
        %1374 = vperm.xlu0 %1373, %v1371
        %v1375 = vpop.permute.xlu0 %1374
        %1377 = vst [vmem:[%s409] sm:$0xff] %v1375
        %s1378 = sand.u32 %s273, 1
        %s1379 = scalar_lea.sflag [#allocation5], %s1378
        %s1380 = sand.u32 %s273, 1
        %s1381 = smul.addr %s1380, 8
        %s1382 = scalar_lea.vmem [#allocation8], %s1381
        // Predicated region
        $region73: #{tpu_custom_call.1} parent=63 // pred_check
          %p1383 = pneg %p283
        $region74: #{tpu_custom_call.1} parent=63 // pred_check_branch
          %1385 = sbr.rel (%p1383) target = $region76
        $region75: #{tpu_custom_call.1} parent=63 // pred_region
          %s1387 = ssub.s32 128, 128
          %1388 = vsyncadd %s1379, %s1387
          %s1389 = smul.addr %s29, 128
          %s1390 = scalar_lea.hbm %s11, %s1389
          %s1392 = sshll.u32 %s1382, 4
          %s1393 = int_to_ptr.vmem [resolvable:$true] %s1392
          %1395 = dma.vmem_to_hbm [thread:$0]  %s1393, 128, %s1390, %s1379
        $region76: #{tpu_custom_call.1} parent=63 // pred_fallthru
          _
      $region64: #{tpu_custom_call.1} parent=5 // pred_fallthru
        _
      %p1396 = scmp.le.s32.totalorder 2, %s24
      // Predicated region
      $region77: #{tpu_custom_call.1} parent=5 // pred_check
        %p1397 = pneg %p1396
      $region78: #{tpu_custom_call.1} parent=5 // pred_check_branch
        %1399 = sbr.rel (%p1397) target = $region80
      $region79: #{tpu_custom_call.1} parent=5 // pred_region
        %s1400 = ssub.s32 %s24, 2
        // Predicated region
        $region81: #{tpu_custom_call.1} parent=79 // pred_check
          %p1401 = pneg %p289
        $region82: #{tpu_custom_call.1} parent=79 // pred_check_branch
          %1403 = sbr.rel (%p1401) target = $region84
        $region83: #{tpu_custom_call.1} parent=79 // pred_region
          %s1404 = sand.u32 %s274, 1
          %s1405 = scalar_lea.sflag [#allocation5], %s1404
          %s1406 = sand.u32 %s274, 1
          %s1407 = smul.addr %s1406, 8
          %s1408 = scalar_lea.vmem [#allocation8], %s1407
          %1409 = dma.done %s1405, 128
        $region84: #{tpu_custom_call.1} parent=79 // pred_fallthru
          _
      $region80: #{tpu_custom_call.1} parent=5 // pred_fallthru
        _
    $region6: #{tpu_custom_call.1} parent=1 // loop_footer
      %s28 = sadd.s32 1, %s24
    $region7: #{tpu_custom_call.1} parent=1 // loop_footer_branch
      %23 = sbr.rel target = $region3
    $region8: #{tpu_custom_call.1} parent=1 // loop_exit
      _
    %1410 = vsyncpa [#allocation4], 1
    %s1411 = scalar_lea.sflag [#allocation4], 1
    %1412 = vsyncpa %s1411, 1
    %1413 = vsyncpa [#allocation7], 1
    %1414 = vsyncpa [#allocation5], 1
    %s1415 = scalar_lea.sflag [#allocation5], 1
    %1416 = vsyncpa %s1415, 1

</llo_original>
